<compile_context>
chip_gen: v7x
topology: tpu7x:2x2x1
jax: 0.10.0
libtpu: 0.0.40
codegen_flags: <defaults>
</compile_context>

<pallas_src>
import functools
import math

import jax
import jax.numpy as jnp
from jax.experimental import pallas as pl
from jax.experimental.pallas import tpu as pltpu


# ----------------------------------------------------------------------------
# Fused Projection-head kernel: linear1 -> gelu -> linear2 -> residual -> LN.
# All intermediates live in VMEM / vregs.
# ----------------------------------------------------------------------------
def _projection_head_kernel(x_ref, w1_ref, w2_ref, g_ref, b_ref, o_ref):
    # x_ref: [tb, d_in] bf16 token-0 features (sliced + cast in the wrapper).
    x = x_ref[...]                                                    # bf16 [tb, d_in]

    # linear1 (bias=False): bf16 MXU operands, f32 accumulation.
    embed1 = jnp.dot(x, w1_ref[...], preferred_element_type=jnp.float32)

    # torch.nn.functional.gelu default = exact erf GELU (computed in f32).
    h = 0.5 * embed1 * (1.0 + jax.lax.erf(embed1 * (1.0 / math.sqrt(2.0))))

    # linear2 (bias=False).  nn.Dropout(p=0.5) is identity in eval mode.
    embed2 = jnp.dot(h.astype(jnp.bfloat16), w2_ref[...],
                     preferred_element_type=jnp.float32)

    e = embed1 + embed2

    # LayerNorm(d_out): biased variance, eps=1e-5, affine, f32 statistics.
    mean = jnp.mean(e, axis=-1, keepdims=True)
    var = jnp.mean((e - mean) ** 2, axis=-1, keepdims=True)
    normed = (e - mean) * jax.lax.rsqrt(var + 1e-5)
    # TODO(synk): emit bf16 here (and in out_shape) if downstream consumers
    # accept it -- halves the output store DMA.
    o_ref[...] = (normed * g_ref[...] + b_ref[...]).astype(o_ref.dtype)


def _pick_block_b(B):
    """Largest divisor of B that is <=512, prefers >=2 grid steps and mult-of-8."""
    divisors = [d for d in range(1, B + 1) if B % d == 0 and d <= 512]
    best = max(divisors)
    two_step = [d for d in divisors if B // d >= 2]
    if two_step:
        mult8 = [d for d in two_step if d % 8 == 0]
        best = max(mult8) if mult8 else max(two_step)
    return best


def text_encoder_forward(hidden_states, params, *, target_token_idx=0,
                         block_b=None):
    """hidden_states: [B, S, d_in] last_hidden_state of the external text base.

    params: output of pack_params() -- bf16 weights stored [d_in, d_out] /
    [d_out, d_out] (transpose of torch layout), f32 gamma/beta of shape
    (1, d_out).
    """
    B, S, d_in = hidden_states.shape
    w1, w2, gamma, beta = params["w1"], params["w2"], params["gamma"], params["beta"]
    d_out = w1.shape[1]

    if block_b is None:
        block_b = _pick_block_b(B)
    assert B % block_b == 0, "batch must be a multiple of the batch tile"

    # Token selection + bf16 cast OUTSIDE the kernel: only [B, d_in] bf16 is
    # DMAed into VMEM (the full [B, S, d_in] block never enters the kernel).
    feats = hidden_states[:, target_token_idx, :].astype(jnp.bfloat16)

    # VMEM budget from the actual blocks: double-buffered activations/output,
    # single-buffered (Buffered(1)) grid-invariant weights, plus headroom.
    x_bytes = block_b * d_in * 2
    w_bytes = (d_in * d_out + d_out * d_out) * 2
    gb_bytes = 2 * d_out * 4
    out_bytes = block_b * d_out * 4
    vmem_bytes = 2 * x_bytes + w_bytes + gb_bytes + 2 * out_bytes
    vmem_limit = min(max(int(1.5 * vmem_bytes) + (1 << 20), 4 << 20), 64 << 20)

    # TODO(synk): for very large d_out (>= ~2K, CLIP-style heads) tile w2 over
    # output columns with an extra grid axis + resident f32 VMEM scratch for
    # embed1/h and a pl.when-finalized LayerNorm so the full [d_out, d_out]
    # weight is not resident (v7x VMEM is only 64 MiB).
    return pl.pallas_call(
        _projection_head_kernel,
        out_shape=jax.ShapeDtypeStruct((B, d_out), jnp.float32),
        grid=(B // block_b,),
        in_specs=[
            pl.BlockSpec((block_b, d_in), lambda i: (i, 0)),
            # Grid-invariant operands: single-buffered (half the VMEM footprint).
            pl.BlockSpec((d_in, d_out), lambda i: (0, 0),
                         pipeline_mode=pl.Buffered(1)),
            pl.BlockSpec((d_out, d_out), lambda i: (0, 0),
                         pipeline_mode=pl.Buffered(1)),
            pl.BlockSpec((1, d_out), lambda i: (0, 0),
                         pipeline_mode=pl.Buffered(1)),
            pl.BlockSpec((1, d_out), lambda i: (0, 0),
                         pipeline_mode=pl.Buffered(1)),
        ],
        out_specs=pl.BlockSpec((block_b, d_out), lambda i: (i, 0)),
        compiler_params=pltpu.CompilerParams(
            dimension_semantics=("parallel",),
            vmem_limit_bytes=vmem_limit,
        ),
    )(feats, w1, w2, gamma, beta)


# ----------------------------------------------------------------------------
# Parameter init / packing
# ----------------------------------------------------------------------------
def init_params_f32(key, transformer_embed_dim, out_dims):
    """f32 reference parameters (torch-equivalent init, stored [d_in, d_out])."""
    k1, k2 = jax.random.split(key)

    def lin(k, d_in, d_out):
        # torch nn.Linear(bias=False) init: U(-1/sqrt(d_in), 1/sqrt(d_in));
        # stored here as [d_in, d_out] (transpose of torch's [d_out, d_in]).
        bound = 1.0 / math.sqrt(d_in)
        return jax.random.uniform(k, (d_in, d_out), jnp.float32,
                                  minval=-bound, maxval=bound)

    return {
        "w1": lin(k1, transformer_embed_dim, out_dims),
        "w2": lin(k2, out_dims, out_dims),
        "gamma": jnp.ones((out_dims,), jnp.float32),
        "beta": jnp.zeros((out_dims,), jnp.float32),
    }


def pack_params(params_f32):
    """One-time conversion to the kernel layout (hoisted out of forward)."""
    d_out = params_f32["w1"].shape[1]
    return {
        "w1": params_f32["w1"].astype(jnp.bfloat16),
        "w2": params_f32["w2"].astype(jnp.bfloat16),
        "gamma": params_f32["gamma"].reshape(1, d_out).astype(jnp.float32),
        "beta": params_f32["beta"].reshape(1, d_out).astype(jnp.float32),
    }


# ----------------------------------------------------------------------------
# Pure-JAX f32 reference (for correctness checking only)
# ----------------------------------------------------------------------------
def _reference_forward(hidden_states, params_f32, target_token_idx=0):
    x = hidden_states[:, target_token_idx, :]
    e1 = x @ params_f32["w1"]
    h = 0.5 * e1 * (1.0 + jax.lax.erf(e1 * (1.0 / math.sqrt(2.0))))
    e2 = h @ params_f32["w2"]
    e = e1 + e2
    mean = jnp.mean(e, axis=-1, keepdims=True)
    var = jnp.mean((e - mean) ** 2, axis=-1, keepdims=True)
    normed = (e - mean) * jax.lax.rsqrt(var + 1e-5)
    return normed * params_f32["gamma"] + params_f32["beta"]


if __name__ == "__main__":
    # Small but lane-dense shapes (feature dims multiples of 128).
    B = 16
    S = 8                        # sequence length fed to the text base
    transformer_embed_dim = 128  # text base hidden size
    out_dims = 128               # shared embedding dim

    key = jax.random.PRNGKey(0)
    k_params, k_feat = jax.random.split(key)
    params_f32 = init_params_f32(k_params, transformer_embed_dim, out_dims)
    params = pack_params(params_f32)     # bf16 weights packed once, not per call

    # TODO(synk): HuggingFace AutoModel / GPT2LMHeadModel text base is an
    # external pretrained model with no source here; its last_hidden_state is
    # synthesized as the kernel input below.
    hidden_states = jax.random.normal(
        k_feat, (B, S, transformer_embed_dim), jnp.float32)

    emb = text_encoder_forward(hidden_states, params, target_token_idx=0)
    emb = jax.block_until_ready(emb)

    assert emb.shape == (B, out_dims)
    assert bool(jnp.all(jnp.isfinite(emb)))

    # bf16 MXU operands -> expect ~1e-2 relative error vs the f32 reference.
    ref = _reference_forward(hidden_states, params_f32, target_token_idx=0)
    max_err = float(jnp.max(jnp.abs(emb - ref)))
    assert max_err < 5e-2, f"max abs error {max_err} too large"

    print("KERNEL_OK")
</pallas_src>

<mosaic_0001>
module attributes {stable_mosaic.version = 11 : i64} {
  func.func @_projection_head_kernel(%arg0: i32, %arg1: memref<8x128xbf16, #tpu.memory_space<vmem>>, %arg2: memref<128x128xbf16, #tpu.memory_space<vmem>>, %arg3: memref<128x128xbf16, #tpu.memory_space<vmem>>, %arg4: memref<1x128xf32, #tpu.memory_space<vmem>>, %arg5: memref<1x128xf32, #tpu.memory_space<vmem>>, %arg6: memref<8x128xf32, #tpu.memory_space<vmem>>) attributes {dimension_semantics = [#tpu.dimension_semantics<parallel>], iteration_bounds = array<i64: 2>, scalar_prefetch = 0 : i64, scratch_operands = 0 : i64, tpu.core_type = #tpu.core_type<tc>, window_params = [{transform_indices = @transform_0, window_bounds = array<i64: 8, 128>}, {pipeline_mode = #tpu.pipeline_mode<synchronous>, transform_indices = @transform_1, window_bounds = array<i64: 128, 128>}, {pipeline_mode = #tpu.pipeline_mode<synchronous>, transform_indices = @transform_2, window_bounds = array<i64: 128, 128>}, {pipeline_mode = #tpu.pipeline_mode<synchronous>, transform_indices = @transform_3, window_bounds = array<i64: 1, 128>}, {pipeline_mode = #tpu.pipeline_mode<synchronous>, transform_indices = @transform_4, window_bounds = array<i64: 1, 128>}, {transform_indices = @transform_5, window_bounds = array<i64: 8, 128>}]} {
    %c0 = arith.constant 0 : index
    %c0_0 = arith.constant 0 : index
    %0 = vector.load %arg1[%c0, %c0_0] : memref<8x128xbf16, #tpu.memory_space<vmem>>, vector<8x128xbf16>
    %c0_1 = arith.constant 0 : index
    %c0_2 = arith.constant 0 : index
    %1 = vector.load %arg2[%c0_1, %c0_2] : memref<128x128xbf16, #tpu.memory_space<vmem>>, vector<128x128xbf16>
    %cst = arith.constant dense<0.000000e+00> : vector<8x128xf32>
    %2 = tpu.matmul %0, %1, %cst {dimension_numbers = #tpu.dot_dimension_numbers<[1], [0], [0], [1], [0, 0, 1, 1], [], []>} : vector<8x128xbf16>, vector<128x128xbf16>, vector<8x128xf32> -> vector<8x128xf32>
    %cst_3 = arith.constant 5.000000e-01 : f32
    %3 = vector.broadcast %cst_3 : f32 to vector<8x128xf32>
    %4 = arith.mulf %3, %2 : vector<8x128xf32>
    %cst_4 = arith.constant 0.707106769 : f32
    %5 = vector.broadcast %cst_4 : f32 to vector<8x128xf32>
    %6 = arith.mulf %2, %5 : vector<8x128xf32>
    %7 = math.erf %6 : vector<8x128xf32>
    %cst_5 = arith.constant 1.000000e+00 : f32
    %8 = vector.broadcast %cst_5 : f32 to vector<8x128xf32>
    %9 = arith.addf %8, %7 : vector<8x128xf32>
    %10 = arith.mulf %4, %9 : vector<8x128xf32>
    %11 = arith.truncf %10 : vector<8x128xf32> to vector<8x128xbf16>
    %c0_6 = arith.constant 0 : index
    %c0_7 = arith.constant 0 : index
    %12 = vector.load %arg3[%c0_6, %c0_7] : memref<128x128xbf16, #tpu.memory_space<vmem>>, vector<128x128xbf16>
    %cst_8 = arith.constant dense<0.000000e+00> : vector<8x128xf32>
    %13 = tpu.matmul %11, %12, %cst_8 {dimension_numbers = #tpu.dot_dimension_numbers<[1], [0], [0], [1], [0, 0, 1, 1], [], []>} : vector<8x128xbf16>, vector<128x128xbf16>, vector<8x128xf32> -> vector<8x128xf32>
    %14 = arith.addf %2, %13 : vector<8x128xf32>
    %cst_9 = arith.constant dense<0.000000e+00> : vector<8xf32>
    %15 = vector.multi_reduction <add>, %14, %cst_9 [1] : vector<8x128xf32> to vector<8xf32>
    %16 = vector.shape_cast %15 : vector<8xf32> to vector<8x1xf32>
    %cst_10 = arith.constant 1.280000e+02 : f32
    %17 = vector.broadcast %cst_10 : f32 to vector<8x1xf32>
    %18 = arith.divf %16, %17 : vector<8x1xf32>
    %19 = vector.broadcast %18 : vector<8x1xf32> to vector<8x128xf32>
    %20 = arith.subf %14, %19 : vector<8x128xf32>
    %21 = arith.mulf %20, %20 : vector<8x128xf32>
    %cst_11 = arith.constant dense<0.000000e+00> : vector<8xf32>
    %22 = vector.multi_reduction <add>, %21, %cst_11 [1] : vector<8x128xf32> to vector<8xf32>
    %23 = vector.shape_cast %22 : vector<8xf32> to vector<8x1xf32>
    %cst_12 = arith.constant 1.280000e+02 : f32
    %24 = vector.broadcast %cst_12 : f32 to vector<8x1xf32>
    %25 = arith.divf %23, %24 : vector<8x1xf32>
    %26 = vector.broadcast %18 : vector<8x1xf32> to vector<8x128xf32>
    %27 = arith.subf %14, %26 : vector<8x128xf32>
    %cst_13 = arith.constant 9.99999974E-6 : f32
    %28 = vector.broadcast %cst_13 : f32 to vector<8x1xf32>
    %29 = arith.addf %25, %28 : vector<8x1xf32>
    %30 = math.rsqrt %29 : vector<8x1xf32>
    %31 = vector.broadcast %30 : vector<8x1xf32> to vector<8x128xf32>
    %32 = arith.mulf %27, %31 : vector<8x128xf32>
    %c0_14 = arith.constant 0 : index
    %c0_15 = arith.constant 0 : index
    %33 = vector.load %arg4[%c0_14, %c0_15] : memref<1x128xf32, #tpu.memory_space<vmem>>, vector<1x128xf32>
    %34 = vector.broadcast %33 : vector<1x128xf32> to vector<8x128xf32>
    %35 = arith.mulf %32, %34 : vector<8x128xf32>
    %c0_16 = arith.constant 0 : index
    %c0_17 = arith.constant 0 : index
    %36 = vector.load %arg5[%c0_16, %c0_17] : memref<1x128xf32, #tpu.memory_space<vmem>>, vector<1x128xf32>
    %37 = vector.broadcast %36 : vector<1x128xf32> to vector<8x128xf32>
    %38 = arith.addf %35, %37 : vector<8x128xf32>
    %c0_18 = arith.constant 0 : index
    %c0_19 = arith.constant 0 : index
    %39 = vector.load %arg6[%c0_18, %c0_19] : memref<8x128xf32, #tpu.memory_space<vmem>>, vector<8x128xf32>
    tpu.vector_store %arg6[%c0_18, %c0_19], %38 {strides = array<i32>} : memref<8x128xf32, #tpu.memory_space<vmem>>, vector<8x128xf32>,
    return
  }
  func.func @transform_0(%arg0: i32) -> (i32, i32) {
    %c0_i32 = arith.constant 0 : i32
    %c0_i32_0 = arith.constant 0 : i32
    return %arg0, %c0_i32 : i32, i32
  }
  func.func @transform_1(%arg0: i32) -> (i32, i32) {
    %c0_i32 = arith.constant 0 : i32
    %c0_i32_0 = arith.constant 0 : i32
    %c0_i32_1 = arith.constant 0 : i32
    return %c0_i32, %c0_i32_0 : i32, i32
  }
  func.func @transform_2(%arg0: i32) -> (i32, i32) {
    %c0_i32 = arith.constant 0 : i32
    %c0_i32_0 = arith.constant 0 : i32
    %c0_i32_1 = arith.constant 0 : i32
    return %c0_i32, %c0_i32_0 : i32, i32
  }
  func.func @transform_3(%arg0: i32) -> (i32, i32) {
    %c0_i32 = arith.constant 0 : i32
    %c0_i32_0 = arith.constant 0 : i32
    %c0_i32_1 = arith.constant 0 : i32
    return %c0_i32, %c0_i32_0 : i32, i32
  }
  func.func @transform_4(%arg0: i32) -> (i32, i32) {
    %c0_i32 = arith.constant 0 : i32
    %c0_i32_0 = arith.constant 0 : i32
    %c0_i32_1 = arith.constant 0 : i32
    return %c0_i32, %c0_i32_0 : i32, i32
  }
  func.func @transform_5(%arg0: i32) -> (i32, i32) {
    %c0_i32 = arith.constant 0 : i32
    %c0_i32_0 = arith.constant 0 : i32
    return %arg0, %c0_i32 : i32, i32
  }
}

</mosaic_0001>

<llo_original>
// kernel: tpu_custom_call.1
$region0: #{tpu_custom_call.1}
  #allocation0 [shape = 'u32[]', space=smem, size = 0x4, offset = 0x4, fixed_abs, tag = 'smem constant byte address 0x4 - core index']
  #allocation1 [shape = 'u32[144,128]{1,0:T(1,128)}', space=vmem, size = 0x12000, scoped, tag = 'internal scratch']
  %s0 = inlined_call_operand.hbm [shape: bf16[16,128], index: 0, kind: input, shape index: {}]
  %s1 = inlined_call_operand.hbm [shape: bf16[128,128], index: 1, kind: input, shape index: {}]
  %s2 = inlined_call_operand.hbm [shape: bf16[128,128], index: 2, kind: input, shape index: {}]
  %s3 = inlined_call_operand.vmem [shape: f32[1,128], index: 3, kind: input, shape index: {}]
  %s4 = inlined_call_operand.vmem [shape: f32[1,128], index: 4, kind: input, shape index: {}]
  %s5 = inlined_call_operand.hbm [shape: f32[16,128], index: 5, kind: output, shape index: {}]
  %s6 = sld [smem:[#allocation0]]
  $region65: #{tpu_custom_call.1} parent=0
    _
  %s8 = ssub.s32 1, %s6
  %s9 = scalar_select 0, %s8, %s6
  $region1: #{tpu_custom_call.1} parent=0
    #allocation2 [shape = 'u8[4096]{0}', space=vmem, size = 0x1000, scoped, tag = 'input window, operand 0']
    #allocation3 [shape = 's32[2]{0}', space=sflag, size = 0x8, scoped, tag = 'scoped memory for tpu_custom_call.1']
    #allocation4 [shape = 's32[2]{0}', space=sflag, size = 0x8, scoped, tag = 'scoped memory for tpu_custom_call.1']
    #allocation5 [shape = 'u8[32768]{0}', space=vmem, size = 0x8000, scoped, tag = 'input window, operand 1, single buffered']
    #allocation6 [shape = 's32[1]{0}', space=sflag, size = 0x4, scoped, tag = 'scoped memory for tpu_custom_call.1']
    #allocation7 [shape = 'u8[32768]{0}', space=vmem, size = 0x8000, scoped, tag = 'input window, operand 2, single buffered']
    #allocation8 [shape = 'u8[8192]{0}', space=vmem, size = 0x2000, scoped, tag = 'output window, operand 0']
    %10 = vsyncpa [#allocation3], 0
    %s11 = scalar_lea.sflag [#allocation3], 1
    %12 = vsyncpa %s11, 0
    %13 = vsyncpa [#allocation6], 0
    %14 = vsyncpa [#allocation4], 0
    %s15 = scalar_lea.sflag [#allocation4], 1
    %16 = vsyncpa %s15, 0
    loop: start=0, step=1, limit=4
    $region2: #{tpu_custom_call.1} parent=1 // loop_pre_header
      _
    $region3: #{tpu_custom_call.1} parent=1 // loop_header
      %s18 = sphi 0, %s22
      %p19 = scmp.ge.s32.totalorder %s18, 4
      %s28 = sphi 0, %s30
      %s31 = sphi 0, %s28
      %s32 = sphi 0, %s31
      %s48 = sphi 0, %s32
      %s52 = sphi 0, %s52
      %s54 = sphi 0, %s52
      %s55 = sphi 0, %s54
      %s69 = sphi 0, %s55
      %s73 = sphi 0, %s73
      %s75 = sphi 0, %s73
      %s76 = sphi 0, %s75
      %s90 = sphi 0, %s76
      %s94 = sphi 0, %s94
      %s96 = sphi 0, %s94
      %s97 = sphi 0, %s96
      %s111 = sphi 0, %s97
      %s115 = sphi 0, %s115
      %s117 = sphi 0, %s115
      %s118 = sphi 0, %s117
      %s132 = sphi 0, %s118
      %s138 = sphi 0, %s140
      %s141 = sphi 0, %s138
      %s142 = sphi 0, %s141
      %s158 = sphi 0, %s142
    $region4: #{tpu_custom_call.1} parent=1 // loop_header_branch
      %21 = sbr.rel (%p19) target = $region8
    $region5: #{tpu_custom_call.1} parent=1 // loop_body
      %s23 = ssub.s32 %s18, 1
      %s24 = ssub.s32 %s18, 2
      %s25 = sadd.s32 %s18, 1
      %s26 = ssub.s32 %s18, %s25
      %p27 = scmp.eq.s32.totalorder %s26, 0
      %s29 = sadd.s32 %s28, 1
      %s30 = scalar_select %p27, %s28, %s29
      %p33 = pneg %p27
      %p34 = scmp.eq.s32.totalorder %s18, 1
      %p35 = por %p33, %p34
      %p36 = scmp.ne.s32.totalorder %s28, %s31
      %p37 = scmp.eq.s32.totalorder %s18, 0
      %p38 = por %p36, %p37
      %p39 = scmp.ne.s32.totalorder %s28, %s31
      %p40 = scmp.eq.s32.totalorder %s23, 1
      %p41 = por %p39, %p40
      %p42 = scmp.ne.s32.totalorder %s31, %s32
      %p43 = scmp.eq.s32.totalorder %s23, 0
      %p44 = por %p42, %p43
      %p45 = scmp.ne.s32.totalorder %s31, %s32
      %p46 = scmp.eq.s32.totalorder %s24, 1
      %p47 = por %p45, %p46
      %p49 = scmp.ne.s32.totalorder %s32, %s48
      %p50 = scmp.eq.s32.totalorder %s24, 0
      %p51 = por %p49, %p50
      %s53 = sadd.s32 %s52, 1
      %p56 = scmp.eq.s32.totalorder %s18, 1
      %p57 = scmp.ne.s32.totalorder %s52, %s54
      %p58 = scmp.eq.s32.totalorder %s18, 0
      %p59 = por %p57, %p58
      %p60 = scmp.ne.s32.totalorder %s52, %s54
      %p61 = scmp.eq.s32.totalorder %s23, 1
      %p62 = por %p60, %p61
      %p63 = scmp.ne.s32.totalorder %s54, %s55
      %p64 = scmp.eq.s32.totalorder %s23, 0
      %p65 = por %p63, %p64
      %p66 = scmp.ne.s32.totalorder %s54, %s55
      %p67 = scmp.eq.s32.totalorder %s24, 1
      %p68 = por %p66, %p67
      %p70 = scmp.ne.s32.totalorder %s55, %s69
      %p71 = scmp.eq.s32.totalorder %s24, 0
      %p72 = por %p70, %p71
      %s74 = sadd.s32 %s73, 1
      %p77 = scmp.eq.s32.totalorder %s18, 1
      %p78 = scmp.ne.s32.totalorder %s73, %s75
      %p79 = scmp.eq.s32.totalorder %s18, 0
      %p80 = por %p78, %p79
      %p81 = scmp.ne.s32.totalorder %s73, %s75
      %p82 = scmp.eq.s32.totalorder %s23, 1
      %p83 = por %p81, %p82
      %p84 = scmp.ne.s32.totalorder %s75, %s76
      %p85 = scmp.eq.s32.totalorder %s23, 0
      %p86 = por %p84, %p85
      %p87 = scmp.ne.s32.totalorder %s75, %s76
      %p88 = scmp.eq.s32.totalorder %s24, 1
      %p89 = por %p87, %p88
      %p91 = scmp.ne.s32.totalorder %s76, %s90
      %p92 = scmp.eq.s32.totalorder %s24, 0
      %p93 = por %p91, %p92
      %s95 = sadd.s32 %s94, 1
      %p98 = scmp.eq.s32.totalorder %s18, 1
      %p99 = scmp.ne.s32.totalorder %s94, %s96
      %p100 = scmp.eq.s32.totalorder %s18, 0
      %p101 = por %p99, %p100
      %p102 = scmp.ne.s32.totalorder %s94, %s96
      %p103 = scmp.eq.s32.totalorder %s23, 1
      %p104 = por %p102, %p103
      %p105 = scmp.ne.s32.totalorder %s96, %s97
      %p106 = scmp.eq.s32.totalorder %s23, 0
      %p107 = por %p105, %p106
      %p108 = scmp.ne.s32.totalorder %s96, %s97
      %p109 = scmp.eq.s32.totalorder %s24, 1
      %p110 = por %p108, %p109
      %p112 = scmp.ne.s32.totalorder %s97, %s111
      %p113 = scmp.eq.s32.totalorder %s24, 0
      %p114 = por %p112, %p113
      %s116 = sadd.s32 %s115, 1
      %p119 = scmp.eq.s32.totalorder %s18, 1
      %p120 = scmp.ne.s32.totalorder %s115, %s117
      %p121 = scmp.eq.s32.totalorder %s18, 0
      %p122 = por %p120, %p121
      %p123 = scmp.ne.s32.totalorder %s115, %s117
      %p124 = scmp.eq.s32.totalorder %s23, 1
      %p125 = por %p123, %p124
      %p126 = scmp.ne.s32.totalorder %s117, %s118
      %p127 = scmp.eq.s32.totalorder %s23, 0
      %p128 = por %p126, %p127
      %p129 = scmp.ne.s32.totalorder %s117, %s118
      %p130 = scmp.eq.s32.totalorder %s24, 1
      %p131 = por %p129, %p130
      %p133 = scmp.ne.s32.totalorder %s118, %s132
      %p134 = scmp.eq.s32.totalorder %s24, 0
      %p135 = por %p133, %p134
      %s136 = ssub.s32 %s18, %s25
      %p137 = scmp.eq.s32.totalorder %s136, 0
      %s139 = sadd.s32 %s138, 1
      %s140 = scalar_select %p137, %s138, %s139
      %p143 = pneg %p137
      %p144 = scmp.eq.s32.totalorder %s18, 1
      %p145 = por %p143, %p144
      %p146 = scmp.ne.s32.totalorder %s138, %s141
      %p147 = scmp.eq.s32.totalorder %s18, 0
      %p148 = por %p146, %p147
      %p149 = scmp.ne.s32.totalorder %s138, %s141
      %p150 = scmp.eq.s32.totalorder %s23, 1
      %p151 = por %p149, %p150
      %p152 = scmp.ne.s32.totalorder %s141, %s142
      %p153 = scmp.eq.s32.totalorder %s23, 0
      %p154 = por %p152, %p153
      %p155 = scmp.ne.s32.totalorder %s141, %s142
      %p156 = scmp.eq.s32.totalorder %s24, 1
      %p157 = por %p155, %p156
      %p159 = scmp.ne.s32.totalorder %s142, %s158
      %p160 = scmp.eq.s32.totalorder %s24, 0
      %p161 = por %p159, %p160
      %p162 = scmp.le.s32.totalorder 1, %s18
      %p163 = scmp.lt.s32.totalorder %s18, 3
      %p164 = pnand %p162, %p163
      %p165 = pneg %p164
      // Predicated region
      $region9: #{tpu_custom_call.1} parent=5 // pred_check
        _
      $region10: #{tpu_custom_call.1} parent=5 // pred_check_branch
        %167 = sbr.rel (%p164) target = $region12
      $region11: #{tpu_custom_call.1} parent=5 // pred_region
        %s168 = ssub.s32 %s18, 1
        // Predicated region
        $region13: #{tpu_custom_call.1} parent=11 // pred_check
          %p169 = pneg %p65
        $region14: #{tpu_custom_call.1} parent=11 // pred_check_branch
          %171 = sbr.rel (%p169) target = $region16
        $region15: #{tpu_custom_call.1} parent=11 // pred_region
          %s173 = ssub.s32 1024, 1024
          %174 = vsyncadd [#allocation6], %s173
          %s175 = sshll.u32 [#allocation5], 4
          %s176 = int_to_ptr.vmem [resolvable:$true] %s175
          %181 = dma.hbm_to_vmem [thread:$0]  %s1, 1024, %s176, [#allocation6], 64, 64, 4
        $region16: #{tpu_custom_call.1} parent=11 // pred_fallthru
          _
        // Predicated region
        $region17: #{tpu_custom_call.1} parent=11 // pred_check
          %p182 = pneg %p86
        $region18: #{tpu_custom_call.1} parent=11 // pred_check_branch
          %184 = sbr.rel (%p182) target = $region20
        $region19: #{tpu_custom_call.1} parent=11 // pred_region
          %s186 = ssub.s32 1024, 1024
          %187 = vsyncadd [#allocation6], %s186
          %s188 = sshll.u32 [#allocation7], 4
          %s189 = int_to_ptr.vmem [resolvable:$true] %s188
          %194 = dma.hbm_to_vmem [thread:$0]  %s2, 1024, %s189, [#allocation6], 64, 64, 4
        $region20: #{tpu_custom_call.1} parent=11 // pred_fallthru
          _
        // Predicated region
        $region21: #{tpu_custom_call.1} parent=11 // pred_check
          %p195 = pneg %p107
        $region22: #{tpu_custom_call.1} parent=11 // pred_check_branch
          %197 = sbr.rel (%p195) target = $region24
        $region23: #{tpu_custom_call.1} parent=11 // pred_region
          _
        $region24: #{tpu_custom_call.1} parent=11 // pred_fallthru
          _
        // Predicated region
        $region25: #{tpu_custom_call.1} parent=11 // pred_check
          %p198 = pneg %p128
        $region26: #{tpu_custom_call.1} parent=11 // pred_check_branch
          %200 = sbr.rel (%p198) target = $region28
        $region27: #{tpu_custom_call.1} parent=11 // pred_region
          _
        $region28: #{tpu_custom_call.1} parent=11 // pred_fallthru
          _
      $region12: #{tpu_custom_call.1} parent=5 // pred_fallthru
        _
      %p201 = scmp.lt.s32.totalorder %s18, 2
      // Predicated region
      $region29: #{tpu_custom_call.1} parent=5 // pred_check
        %p202 = pneg %p201
      $region30: #{tpu_custom_call.1} parent=5 // pred_check_branch
        %204 = sbr.rel (%p202) target = $region32
      $region31: #{tpu_custom_call.1} parent=5 // pred_region
        // Predicated region
        $region33: #{tpu_custom_call.1} parent=31 // pred_check
          %p205 = pneg %p38
        $region34: #{tpu_custom_call.1} parent=31 // pred_check_branch
          %207 = sbr.rel (%p205) target = $region36
        $region35: #{tpu_custom_call.1} parent=31 // pred_region
          %s208 = sand.u32 %s28, 1
          %s209 = scalar_lea.sflag [#allocation3], %s208
          %s210 = sand.u32 %s28, 1
          %s211 = smul.addr %s210, 4
          %s212 = scalar_lea.vmem [#allocation2], %s211
          %s214 = ssub.s32 64, 64
          %215 = vsyncadd %s209, %s214
          %s216 = smul.addr %s18, 64
          %s217 = scalar_lea.hbm %s0, %s216
          %s219 = sshll.u32 %s212, 4
          %s220 = int_to_ptr.vmem [resolvable:$true] %s219
          %222 = dma.hbm_to_vmem [thread:$0]  %s217, 64, %s220, %s209
        $region36: #{tpu_custom_call.1} parent=31 // pred_fallthru
          _
      $region32: #{tpu_custom_call.1} parent=5 // pred_fallthru
        _
      %p223 = scmp.le.s32.totalorder 1, %s18
      %p224 = scmp.lt.s32.totalorder %s18, 3
      %p225 = pnand %p223, %p224
      %p226 = pneg %p225
      // Predicated region
      $region37: #{tpu_custom_call.1} parent=5 // pred_check
        _
      $region38: #{tpu_custom_call.1} parent=5 // pred_check_branch
        %228 = sbr.rel (%p225) target = $region40
      $region39: #{tpu_custom_call.1} parent=5 // pred_region
        %s229 = ssub.s32 %s18, 1
        %s230 = sand.u32 %s31, 1
        %s231 = scalar_lea.sflag [#allocation3], %s230
        %s232 = sand.u32 %s31, 1
        %s233 = smul.addr %s232, 4
        %s234 = scalar_lea.vmem [#allocation2], %s233
        // Predicated region
        $region41: #{tpu_custom_call.1} parent=39 // pred_check
          %p235 = pneg %p44
        $region42: #{tpu_custom_call.1} parent=39 // pred_check_branch
          %237 = sbr.rel (%p235) target = $region44
        $region43: #{tpu_custom_call.1} parent=39 // pred_region
          %238 = dma.done %s231, 64
        $region44: #{tpu_custom_call.1} parent=39 // pred_fallthru
          _
        // Predicated region
        $region45: #{tpu_custom_call.1} parent=39 // pred_check
          %p239 = pneg %p65
        $region46: #{tpu_custom_call.1} parent=39 // pred_check_branch
          %241 = sbr.rel (%p239) target = $region48
        $region47: #{tpu_custom_call.1} parent=39 // pred_region
          %242 = dma.done [#allocation6], 1024
        $region48: #{tpu_custom_call.1} parent=39 // pred_fallthru
          _
        // Predicated region
        $region49: #{tpu_custom_call.1} parent=39 // pred_check
          %p243 = pneg %p86
        $region50: #{tpu_custom_call.1} parent=39 // pred_check_branch
          %245 = sbr.rel (%p243) target = $region52
        $region51: #{tpu_custom_call.1} parent=39 // pred_region
          %246 = dma.done [#allocation6], 1024
        $region52: #{tpu_custom_call.1} parent=39 // pred_fallthru
          _
        %s247 = sand.u32 %s31, 1
        %s248 = scalar_lea.sflag [#allocation3], %s247
        %s249 = sand.u32 %s31, 1
        %s250 = smul.addr %s249, 4
        %s251 = scalar_lea.vmem [#allocation2], %s250
        %p252 = pneg %p44
        %p253 = pneg %p41
        %p254 = pneg %p65
        %p255 = pneg %p62
        %p256 = pneg %p86
        %p257 = pneg %p83
        %p258 = pneg %p107
        %p259 = pneg %p104
        %p260 = pneg %p128
        %p261 = pneg %p125
        %p262 = pneg %p154
        %p263 = pneg %p151
        %s264 = sand.u32 %s141, 1
        %s265 = scalar_lea.sflag [#allocation4], %s264
        %s266 = sand.u32 %s141, 1
        %s267 = smul.addr %s266, 8
        %s268 = scalar_lea.vmem [#allocation8], %s267
        %v270 = vld [vmem:[%s234] sm:$0xf]
        %v271 = vld [vmem:[#allocation5] sm:$0xf]
        %v272 = vld [vmem:[#allocation5 + $0x4] sm:$0xf]
        %v273 = vld [vmem:[#allocation5 + $0x8] sm:$0xf]
        %v274 = vld [vmem:[#allocation5 + $0xc] sm:$0xf]
        %v275 = vld [vmem:[#allocation5 + $0x10] sm:$0xf]
        %v276 = vld [vmem:[#allocation5 + $0x14] sm:$0xf]
        %v277 = vld [vmem:[#allocation5 + $0x18] sm:$0xf]
        %v278 = vld [vmem:[#allocation5 + $0x1c] sm:$0xf]
        %v279 = vld [vmem:[#allocation5 + $0x20] sm:$0xf]
        %v280 = vld [vmem:[#allocation5 + $0x24] sm:$0xf]
        %v281 = vld [vmem:[#allocation5 + $0x28] sm:$0xf]
        %v282 = vld [vmem:[#allocation5 + $0x2c] sm:$0xf]
        %v283 = vld [vmem:[#allocation5 + $0x30] sm:$0xf]
        %v284 = vld [vmem:[#allocation5 + $0x34] sm:$0xf]
        %v285 = vld [vmem:[#allocation5 + $0x38] sm:$0xf]
        %v286 = vld [vmem:[#allocation5 + $0x3c] sm:$0xf]
        %v303 = vunpack.c.l.b16 %v271
        %v304 = vunpack.c.l.b16 %v272
        %v305 = vunpack.c.l.b16 %v273
        %v306 = vunpack.c.l.b16 %v274
        %v307 = vunpack.c.l.b16 %v275
        %v308 = vunpack.c.l.b16 %v276
        %v309 = vunpack.c.l.b16 %v277
        %v310 = vunpack.c.l.b16 %v278
        %v311 = vunpack.c.l.b16 %v279
        %v312 = vunpack.c.l.b16 %v280
        %v313 = vunpack.c.l.b16 %v281
        %v314 = vunpack.c.l.b16 %v282
        %v315 = vunpack.c.l.b16 %v283
        %v316 = vunpack.c.l.b16 %v284
        %v317 = vunpack.c.l.b16 %v285
        %v318 = vunpack.c.l.b16 %v286
        %v319 = vpack.c.b16 %v304, %v303
        %v320 = vpack.c.b16 %v306, %v305
        %v321 = vpack.c.b16 %v308, %v307
        %v322 = vpack.c.b16 %v310, %v309
        %v323 = vpack.c.b16 %v312, %v311
        %v324 = vpack.c.b16 %v314, %v313
        %v325 = vpack.c.b16 %v316, %v315
        %v326 = vpack.c.b16 %v318, %v317
        %335 = vmatprep.subr.bf16.mxu0 0
        %336 = vmatpush1.bf16.msra.mxu0 %v319
        %337 = vmatprep.subr.bf16.mxu0 0
        %338 = vmatpush1.bf16.msra.mxu0 %v320
        %339 = vmatprep.subr.bf16.mxu0 0
        %340 = vmatpush1.bf16.msra.mxu0 %v321
        %341 = vmatprep.subr.bf16.mxu0 0
        %342 = vmatpush1.bf16.msra.mxu0 %v322
        %343 = vmatprep.subr.bf16.mxu0 0
        %344 = vmatpush1.bf16.msra.mxu0 %v323
        %345 = vmatprep.subr.bf16.mxu0 0
        %346 = vmatpush1.bf16.msra.mxu0 %v324
        %347 = vmatprep.subr.bf16.mxu0 0
        %348 = vmatpush1.bf16.msra.mxu0 %v325
        %349 = vmatprep.subr.bf16.mxu0 0
        %350 = vmatpush1.bf16.msra.mxu0 %v326
        %351 = vmatprep.subr.bf16.mxu0 0
        %352 = vmatpush1.bf16.msra.mxu0 0
        %353 = vmatprep.subr.bf16.mxu0 0
        %354 = vmatpush1.bf16.msra.mxu0 0
        %355 = vmatprep.subr.bf16.mxu0 0
        %356 = vmatpush1.bf16.msra.mxu0 0
        %357 = vmatprep.subr.bf16.mxu0 0
        %358 = vmatpush1.bf16.msra.mxu0 0
        %359 = vmatprep.subr.bf16.mxu0 0
        %360 = vmatpush1.bf16.msra.mxu0 0
        %361 = vmatprep.subr.bf16.mxu0 0
        %362 = vmatpush1.bf16.msra.mxu0 0
        %363 = vmatprep.subr.bf16.mxu0 0
        %364 = vmatpush1.bf16.msra.mxu0 0
        %365 = vmatprep.subr.bf16.mxu0 0
        %366 = vmatpush1.bf16.msra.mxu0 0
        %367 = vmatprep.mubr.bf16.mxu0 0
        %368 = vmatmul.mubr.bf16.gmra.mrb[0].mxu0 %v270
        %v369 = vpop.f32.mrb[0].mxu0
        %v370 = vadd.f32 0.0, %v369
        %v371 = vpop.f32.mrb[0].mxu0
        %v372 = vpop.f32.mrb[0].mxu0
        %v373 = vpop.f32.mrb[0].mxu0
        %374 = vdwg.mxu0
        %v375 = vmul.f32 %v370, 0.5
        %v376 = vmul.f32 %v370, 0.70710677
        %v377 = verf.f32.pop %v376
        %v378 = vadd.f32 %v377, 1.0
        %v379 = vmul.f32 %v375, %v378
        %v380 = vpack.c.bf16 %v379, %v379
        %v381 = vld [vmem:[#allocation7] sm:$0xf]
        %v382 = vld [vmem:[#allocation7 + $0x4] sm:$0xf]
        %v383 = vld [vmem:[#allocation7 + $0x8] sm:$0xf]
        %v384 = vld [vmem:[#allocation7 + $0xc] sm:$0xf]
        %v385 = vld [vmem:[#allocation7 + $0x10] sm:$0xf]
        %v386 = vld [vmem:[#allocation7 + $0x14] sm:$0xf]
        %v387 = vld [vmem:[#allocation7 + $0x18] sm:$0xf]
        %v388 = vld [vmem:[#allocation7 + $0x1c] sm:$0xf]
        %v389 = vld [vmem:[#allocation7 + $0x20] sm:$0xf]
        %v390 = vld [vmem:[#allocation7 + $0x24] sm:$0xf]
        %v391 = vld [vmem:[#allocation7 + $0x28] sm:$0xf]
        %v392 = vld [vmem:[#allocation7 + $0x2c] sm:$0xf]
        %v393 = vld [vmem:[#allocation7 + $0x30] sm:$0xf]
        %v394 = vld [vmem:[#allocation7 + $0x34] sm:$0xf]
        %v395 = vld [vmem:[#allocation7 + $0x38] sm:$0xf]
        %v396 = vld [vmem:[#allocation7 + $0x3c] sm:$0xf]
        %v413 = vunpack.c.l.b16 %v381
        %v414 = vunpack.c.l.b16 %v382
        %v415 = vunpack.c.l.b16 %v383
        %v416 = vunpack.c.l.b16 %v384
        %v417 = vunpack.c.l.b16 %v385
        %v418 = vunpack.c.l.b16 %v386
        %v419 = vunpack.c.l.b16 %v387
        %v420 = vunpack.c.l.b16 %v388
        %v421 = vunpack.c.l.b16 %v389
        %v422 = vunpack.c.l.b16 %v390
        %v423 = vunpack.c.l.b16 %v391
        %v424 = vunpack.c.l.b16 %v392
        %v425 = vunpack.c.l.b16 %v393
        %v426 = vunpack.c.l.b16 %v394
        %v427 = vunpack.c.l.b16 %v395
        %v428 = vunpack.c.l.b16 %v396
        %v429 = vpack.c.b16 %v414, %v413
        %v430 = vpack.c.b16 %v416, %v415
        %v431 = vpack.c.b16 %v418, %v417
        %v432 = vpack.c.b16 %v420, %v419
        %v433 = vpack.c.b16 %v422, %v421
        %v434 = vpack.c.b16 %v424, %v423
        %v435 = vpack.c.b16 %v426, %v425
        %v436 = vpack.c.b16 %v428, %v427
        %445 = vmatprep.subr.bf16.mxu0 0
        %446 = vmatpush1.bf16.msra.mxu0 %v429
        %447 = vmatprep.subr.bf16.mxu0 0
        %448 = vmatpush1.bf16.msra.mxu0 %v430
        %449 = vmatprep.subr.bf16.mxu0 0
        %450 = vmatpush1.bf16.msra.mxu0 %v431
        %451 = vmatprep.subr.bf16.mxu0 0
        %452 = vmatpush1.bf16.msra.mxu0 %v432
        %453 = vmatprep.subr.bf16.mxu0 0
        %454 = vmatpush1.bf16.msra.mxu0 %v433
        %455 = vmatprep.subr.bf16.mxu0 0
        %456 = vmatpush1.bf16.msra.mxu0 %v434
        %457 = vmatprep.subr.bf16.mxu0 0
        %458 = vmatpush1.bf16.msra.mxu0 %v435
        %459 = vmatprep.subr.bf16.mxu0 0
        %460 = vmatpush1.bf16.msra.mxu0 %v436
        %461 = vmatprep.subr.bf16.mxu0 0
        %462 = vmatpush1.bf16.msra.mxu0 0
        %463 = vmatprep.subr.bf16.mxu0 0
        %464 = vmatpush1.bf16.msra.mxu0 0
        %465 = vmatprep.subr.bf16.mxu0 0
        %466 = vmatpush1.bf16.msra.mxu0 0
        %467 = vmatprep.subr.bf16.mxu0 0
        %468 = vmatpush1.bf16.msra.mxu0 0
        %469 = vmatprep.subr.bf16.mxu0 0
        %470 = vmatpush1.bf16.msra.mxu0 0
        %471 = vmatprep.subr.bf16.mxu0 0
        %472 = vmatpush1.bf16.msra.mxu0 0
        %473 = vmatprep.subr.bf16.mxu0 0
        %474 = vmatpush1.bf16.msra.mxu0 0
        %475 = vmatprep.subr.bf16.mxu0 0
        %476 = vmatpush1.bf16.msra.mxu0 0
        %477 = vmatprep.mubr.bf16.mxu0 0
        %478 = vmatmul.mubr.bf16.gmra.mrb[0].mxu0 %v380
        %v479 = vpop.f32.mrb[0].mxu0
        %v480 = vadd.f32 0.0, %v479
        %v481 = vpop.f32.mrb[0].mxu0
        %v482 = vpop.f32.mrb[0].mxu0
        %v483 = vpop.f32.mrb[0].mxu0
        %484 = vdwg.mxu0
        %v485 = vadd.f32 %v370, %v480
        %486 = vadd.xlane.f32.xlu0 %v485
        %v487 = vpop.xlane.xlu0 %486
        %v488 = vrcp.pop 128.0
        %v489 = vmul.f32 %v487, %v488
        %v490 = vsub.f32 %v485, %v489
        %v491 = vmul.f32 %v490, %v490
        %492 = vadd.xlane.f32.xlu0 %v491
        %v493 = vpop.xlane.xlu0 %492
        %v494 = vmul.f32 %v493, %v488
        %v495 = vadd.f32 %v494, 1e-05
        %v496 = vrsqrt.pop %v495
        %v497 = vmul.f32 %v490, %v496
        %v498 = vld [vmem:[%s3] sm:$0x1]
        %v500 = vlaneseq
        %v501 = vshrl.u32 %v500, 7
        %v502 = vsub.s32 0, %v501
        %v503 = vrot.slane %v498, %v502
        %v505 = vmul.f32 %v497, %v503
        %v506 = vld [vmem:[%s4] sm:$0x1]
        %v508 = vlaneseq
        %v509 = vshrl.u32 %v508, 7
        %v510 = vsub.s32 0, %v509
        %v511 = vrot.slane %v506, %v510
        %v513 = vadd.f32 %v505, %v511
        %514 = vst [vmem:[%s268] sm:$0xff] %v513
        %s515 = sand.u32 %s141, 1
        %s516 = scalar_lea.sflag [#allocation4], %s515
        %s517 = sand.u32 %s141, 1
        %s518 = smul.addr %s517, 8
        %s519 = scalar_lea.vmem [#allocation8], %s518
        // Predicated region
        $region53: #{tpu_custom_call.1} parent=39 // pred_check
          %p520 = pneg %p151
        $region54: #{tpu_custom_call.1} parent=39 // pred_check_branch
          %522 = sbr.rel (%p520) target = $region56
        $region55: #{tpu_custom_call.1} parent=39 // pred_region
          %s524 = ssub.s32 128, 128
          %525 = vsyncadd %s516, %s524
          %s526 = smul.addr %s23, 128
          %s527 = scalar_lea.hbm %s5, %s526
          %s529 = sshll.u32 %s519, 4
          %s530 = int_to_ptr.vmem [resolvable:$true] %s529
          %532 = dma.vmem_to_hbm [thread:$0]  %s530, 128, %s527, %s516
        $region56: #{tpu_custom_call.1} parent=39 // pred_fallthru
          _
      $region40: #{tpu_custom_call.1} parent=5 // pred_fallthru
        _
      %p533 = scmp.le.s32.totalorder 2, %s18
      // Predicated region
      $region57: #{tpu_custom_call.1} parent=5 // pred_check
        %p534 = pneg %p533
      $region58: #{tpu_custom_call.1} parent=5 // pred_check_branch
        %536 = sbr.rel (%p534) target = $region60
      $region59: #{tpu_custom_call.1} parent=5 // pred_region
        %s537 = ssub.s32 %s18, 2
        // Predicated region
        $region61: #{tpu_custom_call.1} parent=59 // pred_check
          %p538 = pneg %p157
        $region62: #{tpu_custom_call.1} parent=59 // pred_check_branch
          %540 = sbr.rel (%p538) target = $region64
        $region63: #{tpu_custom_call.1} parent=59 // pred_region
          %s541 = sand.u32 %s142, 1
          %s542 = scalar_lea.sflag [#allocation4], %s541
          %s543 = sand.u32 %s142, 1
          %s544 = smul.addr %s543, 8
          %s545 = scalar_lea.vmem [#allocation8], %s544
          %546 = dma.done %s542, 128
        $region64: #{tpu_custom_call.1} parent=59 // pred_fallthru
          _
      $region60: #{tpu_custom_call.1} parent=5 // pred_fallthru
        _
    $region6: #{tpu_custom_call.1} parent=1 // loop_footer
      %s22 = sadd.s32 1, %s18
    $region7: #{tpu_custom_call.1} parent=1 // loop_footer_branch
      %17 = sbr.rel target = $region3
    $region8: #{tpu_custom_call.1} parent=1 // loop_exit
      _
    %547 = vsyncpa [#allocation3], 1
    %s548 = scalar_lea.sflag [#allocation3], 1
    %549 = vsyncpa %s548, 1
    %550 = vsyncpa [#allocation6], 1
    %551 = vsyncpa [#allocation4], 1
    %s552 = scalar_lea.sflag [#allocation4], 1
    %553 = vsyncpa %s552, 1

</llo_original>
